<compile_context>
chip_gen: v7x
topology: tpu7x:2x2x1
jax: 0.10.0
libtpu: 0.0.40
codegen_flags: <defaults>
</compile_context>

<pallas_src>
import random

import numpy as np
import jax
import jax.numpy as jnp
from jax.experimental import pallas as pl
from jax.experimental.pallas import tpu as pltpu


def _make_cutout_kernel(rect_masks: int, B: int, Bb: int, F: int, Tt: int):
    def kernel(rects_ref, x_ref, o_ref):
        # rects_ref: SMEM int32[B * rect_masks * 4]
        #   per-rect layout: [rect_x (freq start), w_x (freq width),
        #                     rect_y (time start), w_y (time width)]
        # x_ref / o_ref: VMEM (Bb, F, Tt) tile.
        blk_b = pl.program_id(0)
        t0 = pl.program_id(1) * Tt  # element offset of this time tile

        # 1-D index vectors: per-rect range compares touch F + Tt elements;
        # only the broadcast AND/OR touches the full (F, Tt) tile.
        fi = jax.lax.broadcasted_iota(jnp.int32, (F, 1), 0)        # freq index
        ti = jax.lax.broadcasted_iota(jnp.int32, (1, Tt), 1) + t0  # global time index

        zero = jnp.zeros((), x_ref.dtype)  # scalar zero (no tile materialization)

        def rect_mask(m, base):
            rx = rects_ref[base + 4 * m + 0]
            wx = rects_ref[base + 4 * m + 1]
            ry = rects_ref[base + 4 * m + 2]
            wy = rects_ref[base + 4 * m + 3]
            fmask = (fi >= rx) & (fi < rx + wx)   # (F, 1)
            tmask = (ti >= ry) & (ti < ry + wy)   # (1, Tt)
            return fmask & tmask                  # broadcasts to (F, Tt)

        def body(bb):
            # Clamp the global batch index so the ragged last block never
            # reads SMEM out of bounds (its out-of-range store is masked by
            # Pallas anyway).
            gb = jnp.minimum(blk_b * Bb + bb, B - 1)
            base = gb * (rect_masks * 4)
            mask = rect_mask(0, base)
            for m in range(1, rect_masks):        # static unroll: rects are few
                mask = mask | rect_mask(m, base)
            xb = x_ref[bb]                        # single load of the slice
            o_ref[bb] = jnp.where(mask, zero, xb) # one select, one dense store

        if Bb <= 4:
            for bb in range(Bb):                  # short static unroll
                body(bb)
        else:
            # fori_loop bounds vreg live ranges when many large slices per block.
            jax.lax.fori_loop(0, Bb, lambda bb, c: (body(bb), c)[1], 0)

    return kernel


def _pick_tiles(B: int, F: int, T: int, itemsize: int,
                target_bytes: int = 4 << 20):
    """Pick (Bb, Tt): batch elements per block and time-tile width.

    Time tiles are multiples of 128 lanes (lane-dense stores) that divide T
    (falling back to full T if T is not a multiple of 128 -- full extent is
    always legal).  The block targets ~4 MiB (in+out double buffered stays
    well inside even v7x's 64 MiB VMEM), and the total grid is kept >= 2
    steps so the pipeline overlaps and both v7x TensorCores are fed.
    """
    if T % 128 == 0:
        tt_opts = sorted(t for t in range(128, T + 1, 128) if T % t == 0)
    else:
        tt_opts = [T]

    # Largest time tile whose single-batch (F, Tt) slice fits the budget.
    Tt = tt_opts[0]
    for t in tt_opts:
        if F * t * itemsize <= target_bytes:
            Tt = t

    def bb_for(tt):
        b = target_bytes // max(1, F * tt * itemsize)
        # Cap Bb to bound vreg live ranges in the per-batch loop.
        return int(max(1, min(B, b, 8)))

    Bb = bb_for(Tt)
    cdiv = lambda a, b: -(-a // b)

    # Guarantee >= 2 total grid steps when the shape allows it.
    while cdiv(B, Bb) * (T // Tt) < 2:
        smaller = [t for t in tt_opts if t < Tt]
        if smaller:
            Tt = smaller[-1]
            Bb = bb_for(Tt)
        elif Bb > 1:
            Bb = max(1, Bb // 2)
        else:
            break
    return Bb, Tt


def spec_cutout(x: jax.Array, rects: jax.Array, rect_masks: int) -> jax.Array:
    """x: [B, F, T] float, rects: [B*rect_masks*4] int32."""
    if rect_masks == 0:
        return x

    B, F, T = x.shape
    itemsize = x.dtype.itemsize
    Bb, Tt = _pick_tiles(B, F, T, itemsize)
    block_bytes = Bb * F * Tt * itemsize
    # in + out each double buffered ~= 4x block bytes; leave headroom.
    vmem_limit = int(min(56 << 20, max(32 << 20, 6 * block_bytes)))

    kernel = _make_cutout_kernel(rect_masks, B, Bb, F, Tt)
    grid = (pl.cdiv(B, Bb), T // Tt)

    return pl.pallas_call(
        kernel,
        out_shape=jax.ShapeDtypeStruct((B, F, T), x.dtype),
        grid_spec=pltpu.PrefetchScalarGridSpec(
            num_scalar_prefetch=1,
            grid=grid,
            in_specs=[pl.BlockSpec((Bb, F, Tt), lambda b, t, rects: (b, 0, t))],
            out_specs=pl.BlockSpec((Bb, F, Tt), lambda b, t, rects: (b, 0, t)),
        ),
        # Alias x -> output: matches the PyTorch module's in-place update and
        # avoids an extra B*F*T HBM allocation when x is donated.  Flat input
        # index 1 == x (index 0 is the scalar-prefetch rects array).
        input_output_aliases={1: 0},
        compiler_params=pltpu.CompilerParams(
            dimension_semantics=("parallel", "parallel"),
            vmem_limit_bytes=vmem_limit,
        ),
    )(rects, x)


def draw_rects(B: int, F: int, T: int, rect_masks: int, rect_time: int,
               rect_freq: int, seed: int = 0) -> np.ndarray:
    """Host-side RNG, identical loop order / randint semantics to the PyTorch module."""
    rng = random.Random(seed)
    out = np.zeros((B, rect_masks, 4), dtype=np.int32)
    for idx in range(B):
        for i in range(rect_masks):
            rect_x = rng.randint(0, F - rect_freq)   # inclusive
            rect_y = rng.randint(0, T - rect_time)   # inclusive
            w_x = rng.randint(0, rect_freq)          # inclusive
            w_y = rng.randint(0, rect_time)          # inclusive
            out[idx, i] = (rect_x, w_x, rect_y, w_y)
    return out.reshape(-1)


def reference(x: np.ndarray, rects_flat: np.ndarray, rect_masks: int) -> np.ndarray:
    x = x.copy()
    B = x.shape[0]
    rects = rects_flat.reshape(B, rect_masks, 4)
    for idx in range(B):
        for i in range(rect_masks):
            rx, wx, ry, wy = rects[idx, i]
            x[idx, rx:rx + wx, ry:ry + wy] = 0.0
    return x


if __name__ == "__main__":
    # Small but lane-dense shapes: F multiple of 8 (sublanes), T multiple of 128
    # (lanes).  With the new picker this becomes a (1, 2) grid of (2, 64, 128)
    # blocks, so the pipeline has two steps even at this tiny size.
    B, F, T = 2, 64, 256
    rect_masks, rect_time, rect_freq = 5, 5, 20

    key = jax.random.PRNGKey(0)
    x = jax.random.normal(key, (B, F, T), dtype=jnp.float32)
    x_np = np.asarray(x)  # snapshot before the (aliased) kernel call

    rects_np = draw_rects(B, F, T, rect_masks, rect_time, rect_freq, seed=0)
    rects = jnp.asarray(rects_np, dtype=jnp.int32)

    out = spec_cutout(x, rects, rect_masks)
    out = jax.block_until_ready(out)

    expected = reference(x_np, rects_np, rect_masks)
    np.testing.assert_allclose(np.asarray(out), expected, rtol=0, atol=0)

    print("KERNEL_OK")
</pallas_src>

<mosaic_0001>
module attributes {stable_mosaic.version = 11 : i64} {
  func.func @kernel(%arg0: i32, %arg1: i32, %arg2: memref<40xi32, #tpu.memory_space<smem>>, %arg3: memref<2x64x128xf32, #tpu.memory_space<vmem>>, %arg4: memref<2x64x128xf32, #tpu.memory_space<vmem>>) attributes {dimension_semantics = [#tpu.dimension_semantics<parallel>, #tpu.dimension_semantics<parallel>], iteration_bounds = array<i64: 1, 2>, scalar_prefetch = 1 : i64, scratch_operands = 0 : i64, tpu.core_type = #tpu.core_type<tc>, window_params = [{transform_indices = @transform_0, window_bounds = array<i64: 2, 64, 128>}, {transform_indices = @transform_1, window_bounds = array<i64: 2, 64, 128>}]} {
    %c128_i32 = arith.constant 128 : i32
    %0 = arith.muli %arg1, %c128_i32 : i32
    %1 = tpu.iota {dimensions = array<i32: 0>} : vector<64x1xi32>
    %2 = tpu.iota {dimensions = array<i32: 1>} : vector<1x128xi32>
    %3 = vector.broadcast %0 : i32 to vector<1x128xi32>
    %4 = arith.addi %2, %3 : vector<1x128xi32>
    %c2_i32 = arith.constant 2 : i32
    %5 = arith.muli %arg0, %c2_i32 : i32
    %c0_i32 = arith.constant 0 : i32
    %6 = arith.addi %5, %c0_i32 : i32
    %c1_i32 = arith.constant 1 : i32
    %7 = arith.minsi %6, %c1_i32 : i32
    %c20_i32 = arith.constant 20 : i32
    %8 = arith.muli %7, %c20_i32 : i32
    %c0_i32_0 = arith.constant 0 : i32
    %9 = arith.addi %8, %c0_i32_0 : i32
    %c0_i32_1 = arith.constant 0 : i32
    %10 = arith.addi %9, %c0_i32_1 : i32
    %11 = arith.index_cast %10 : i32 to index
    %12 = memref.load %arg2[%11] : memref<40xi32, #tpu.memory_space<smem>>
    %c0_i32_2 = arith.constant 0 : i32
    %13 = arith.addi %8, %c0_i32_2 : i32
    %c1_i32_3 = arith.constant 1 : i32
    %14 = arith.addi %13, %c1_i32_3 : i32
    %15 = arith.index_cast %14 : i32 to index
    %16 = memref.load %arg2[%15] : memref<40xi32, #tpu.memory_space<smem>>
    %c0_i32_4 = arith.constant 0 : i32
    %17 = arith.addi %8, %c0_i32_4 : i32
    %c2_i32_5 = arith.constant 2 : i32
    %18 = arith.addi %17, %c2_i32_5 : i32
    %19 = arith.index_cast %18 : i32 to index
    %20 = memref.load %arg2[%19] : memref<40xi32, #tpu.memory_space<smem>>
    %c0_i32_6 = arith.constant 0 : i32
    %21 = arith.addi %8, %c0_i32_6 : i32
    %c3_i32 = arith.constant 3 : i32
    %22 = arith.addi %21, %c3_i32 : i32
    %23 = arith.index_cast %22 : i32 to index
    %24 = memref.load %arg2[%23] : memref<40xi32, #tpu.memory_space<smem>>
    %25 = vector.broadcast %12 : i32 to vector<64x1xi32>
    %26 = arith.cmpi sge, %1, %25 : vector<64x1xi32>
    %27 = arith.addi %12, %16 : i32
    %28 = vector.broadcast %27 : i32 to vector<64x1xi32>
    %29 = arith.cmpi slt, %1, %28 : vector<64x1xi32>
    %30 = arith.andi %26, %29 : vector<64x1xi1>
    %31 = vector.broadcast %20 : i32 to vector<1x128xi32>
    %32 = arith.cmpi sge, %4, %31 : vector<1x128xi32>
    %33 = arith.addi %20, %24 : i32
    %34 = vector.broadcast %33 : i32 to vector<1x128xi32>
    %35 = arith.cmpi slt, %4, %34 : vector<1x128xi32>
    %36 = arith.andi %32, %35 : vector<1x128xi1>
    %37 = vector.broadcast %30 : vector<64x1xi1> to vector<64x128xi1>
    %38 = vector.broadcast %36 : vector<1x128xi1> to vector<64x128xi1>
    %39 = arith.andi %37, %38 : vector<64x128xi1>
    %c4_i32 = arith.constant 4 : i32
    %40 = arith.addi %8, %c4_i32 : i32
    %c0_i32_7 = arith.constant 0 : i32
    %41 = arith.addi %40, %c0_i32_7 : i32
    %42 = arith.index_cast %41 : i32 to index
    %43 = memref.load %arg2[%42] : memref<40xi32, #tpu.memory_space<smem>>
    %c4_i32_8 = arith.constant 4 : i32
    %44 = arith.addi %8, %c4_i32_8 : i32
    %c1_i32_9 = arith.constant 1 : i32
    %45 = arith.addi %44, %c1_i32_9 : i32
    %46 = arith.index_cast %45 : i32 to index
    %47 = memref.load %arg2[%46] : memref<40xi32, #tpu.memory_space<smem>>
    %c4_i32_10 = arith.constant 4 : i32
    %48 = arith.addi %8, %c4_i32_10 : i32
    %c2_i32_11 = arith.constant 2 : i32
    %49 = arith.addi %48, %c2_i32_11 : i32
    %50 = arith.index_cast %49 : i32 to index
    %51 = memref.load %arg2[%50] : memref<40xi32, #tpu.memory_space<smem>>
    %c4_i32_12 = arith.constant 4 : i32
    %52 = arith.addi %8, %c4_i32_12 : i32
    %c3_i32_13 = arith.constant 3 : i32
    %53 = arith.addi %52, %c3_i32_13 : i32
    %54 = arith.index_cast %53 : i32 to index
    %55 = memref.load %arg2[%54] : memref<40xi32, #tpu.memory_space<smem>>
    %56 = vector.broadcast %43 : i32 to vector<64x1xi32>
    %57 = arith.cmpi sge, %1, %56 : vector<64x1xi32>
    %58 = arith.addi %43, %47 : i32
    %59 = vector.broadcast %58 : i32 to vector<64x1xi32>
    %60 = arith.cmpi slt, %1, %59 : vector<64x1xi32>
    %61 = arith.andi %57, %60 : vector<64x1xi1>
    %62 = vector.broadcast %51 : i32 to vector<1x128xi32>
    %63 = arith.cmpi sge, %4, %62 : vector<1x128xi32>
    %64 = arith.addi %51, %55 : i32
    %65 = vector.broadcast %64 : i32 to vector<1x128xi32>
    %66 = arith.cmpi slt, %4, %65 : vector<1x128xi32>
    %67 = arith.andi %63, %66 : vector<1x128xi1>
    %68 = vector.broadcast %61 : vector<64x1xi1> to vector<64x128xi1>
    %69 = vector.broadcast %67 : vector<1x128xi1> to vector<64x128xi1>
    %70 = arith.andi %68, %69 : vector<64x128xi1>
    %71 = arith.ori %39, %70 : vector<64x128xi1>
    %c8_i32 = arith.constant 8 : i32
    %72 = arith.addi %8, %c8_i32 : i32
    %c0_i32_14 = arith.constant 0 : i32
    %73 = arith.addi %72, %c0_i32_14 : i32
    %74 = arith.index_cast %73 : i32 to index
    %75 = memref.load %arg2[%74] : memref<40xi32, #tpu.memory_space<smem>>
    %c8_i32_15 = arith.constant 8 : i32
    %76 = arith.addi %8, %c8_i32_15 : i32
    %c1_i32_16 = arith.constant 1 : i32
    %77 = arith.addi %76, %c1_i32_16 : i32
    %78 = arith.index_cast %77 : i32 to index
    %79 = memref.load %arg2[%78] : memref<40xi32, #tpu.memory_space<smem>>
    %c8_i32_17 = arith.constant 8 : i32
    %80 = arith.addi %8, %c8_i32_17 : i32
    %c2_i32_18 = arith.constant 2 : i32
    %81 = arith.addi %80, %c2_i32_18 : i32
    %82 = arith.index_cast %81 : i32 to index
    %83 = memref.load %arg2[%82] : memref<40xi32, #tpu.memory_space<smem>>
    %c8_i32_19 = arith.constant 8 : i32
    %84 = arith.addi %8, %c8_i32_19 : i32
    %c3_i32_20 = arith.constant 3 : i32
    %85 = arith.addi %84, %c3_i32_20 : i32
    %86 = arith.index_cast %85 : i32 to index
    %87 = memref.load %arg2[%86] : memref<40xi32, #tpu.memory_space<smem>>
    %88 = vector.broadcast %75 : i32 to vector<64x1xi32>
    %89 = arith.cmpi sge, %1, %88 : vector<64x1xi32>
    %90 = arith.addi %75, %79 : i32
    %91 = vector.broadcast %90 : i32 to vector<64x1xi32>
    %92 = arith.cmpi slt, %1, %91 : vector<64x1xi32>
    %93 = arith.andi %89, %92 : vector<64x1xi1>
    %94 = vector.broadcast %83 : i32 to vector<1x128xi32>
    %95 = arith.cmpi sge, %4, %94 : vector<1x128xi32>
    %96 = arith.addi %83, %87 : i32
    %97 = vector.broadcast %96 : i32 to vector<1x128xi32>
    %98 = arith.cmpi slt, %4, %97 : vector<1x128xi32>
    %99 = arith.andi %95, %98 : vector<1x128xi1>
    %100 = vector.broadcast %93 : vector<64x1xi1> to vector<64x128xi1>
    %101 = vector.broadcast %99 : vector<1x128xi1> to vector<64x128xi1>
    %102 = arith.andi %100, %101 : vector<64x128xi1>
    %103 = arith.ori %71, %102 : vector<64x128xi1>
    %c12_i32 = arith.constant 12 : i32
    %104 = arith.addi %8, %c12_i32 : i32
    %c0_i32_21 = arith.constant 0 : i32
    %105 = arith.addi %104, %c0_i32_21 : i32
    %106 = arith.index_cast %105 : i32 to index
    %107 = memref.load %arg2[%106] : memref<40xi32, #tpu.memory_space<smem>>
    %c12_i32_22 = arith.constant 12 : i32
    %108 = arith.addi %8, %c12_i32_22 : i32
    %c1_i32_23 = arith.constant 1 : i32
    %109 = arith.addi %108, %c1_i32_23 : i32
    %110 = arith.index_cast %109 : i32 to index
    %111 = memref.load %arg2[%110] : memref<40xi32, #tpu.memory_space<smem>>
    %c12_i32_24 = arith.constant 12 : i32
    %112 = arith.addi %8, %c12_i32_24 : i32
    %c2_i32_25 = arith.constant 2 : i32
    %113 = arith.addi %112, %c2_i32_25 : i32
    %114 = arith.index_cast %113 : i32 to index
    %115 = memref.load %arg2[%114] : memref<40xi32, #tpu.memory_space<smem>>
    %c12_i32_26 = arith.constant 12 : i32
    %116 = arith.addi %8, %c12_i32_26 : i32
    %c3_i32_27 = arith.constant 3 : i32
    %117 = arith.addi %116, %c3_i32_27 : i32
    %118 = arith.index_cast %117 : i32 to index
    %119 = memref.load %arg2[%118] : memref<40xi32, #tpu.memory_space<smem>>
    %120 = vector.broadcast %107 : i32 to vector<64x1xi32>
    %121 = arith.cmpi sge, %1, %120 : vector<64x1xi32>
    %122 = arith.addi %107, %111 : i32
    %123 = vector.broadcast %122 : i32 to vector<64x1xi32>
    %124 = arith.cmpi slt, %1, %123 : vector<64x1xi32>
    %125 = arith.andi %121, %124 : vector<64x1xi1>
    %126 = vector.broadcast %115 : i32 to vector<1x128xi32>
    %127 = arith.cmpi sge, %4, %126 : vector<1x128xi32>
    %128 = arith.addi %115, %119 : i32
    %129 = vector.broadcast %128 : i32 to vector<1x128xi32>
    %130 = arith.cmpi slt, %4, %129 : vector<1x128xi32>
    %131 = arith.andi %127, %130 : vector<1x128xi1>
    %132 = vector.broadcast %125 : vector<64x1xi1> to vector<64x128xi1>
    %133 = vector.broadcast %131 : vector<1x128xi1> to vector<64x128xi1>
    %134 = arith.andi %132, %133 : vector<64x128xi1>
    %135 = arith.ori %103, %134 : vector<64x128xi1>
    %c16_i32 = arith.constant 16 : i32
    %136 = arith.addi %8, %c16_i32 : i32
    %c0_i32_28 = arith.constant 0 : i32
    %137 = arith.addi %136, %c0_i32_28 : i32
    %138 = arith.index_cast %137 : i32 to index
    %139 = memref.load %arg2[%138] : memref<40xi32, #tpu.memory_space<smem>>
    %c16_i32_29 = arith.constant 16 : i32
    %140 = arith.addi %8, %c16_i32_29 : i32
    %c1_i32_30 = arith.constant 1 : i32
    %141 = arith.addi %140, %c1_i32_30 : i32
    %142 = arith.index_cast %141 : i32 to index
    %143 = memref.load %arg2[%142] : memref<40xi32, #tpu.memory_space<smem>>
    %c16_i32_31 = arith.constant 16 : i32
    %144 = arith.addi %8, %c16_i32_31 : i32
    %c2_i32_32 = arith.constant 2 : i32
    %145 = arith.addi %144, %c2_i32_32 : i32
    %146 = arith.index_cast %145 : i32 to index
    %147 = memref.load %arg2[%146] : memref<40xi32, #tpu.memory_space<smem>>
    %c16_i32_33 = arith.constant 16 : i32
    %148 = arith.addi %8, %c16_i32_33 : i32
    %c3_i32_34 = arith.constant 3 : i32
    %149 = arith.addi %148, %c3_i32_34 : i32
    %150 = arith.index_cast %149 : i32 to index
    %151 = memref.load %arg2[%150] : memref<40xi32, #tpu.memory_space<smem>>
    %152 = vector.broadcast %139 : i32 to vector<64x1xi32>
    %153 = arith.cmpi sge, %1, %152 : vector<64x1xi32>
    %154 = arith.addi %139, %143 : i32
    %155 = vector.broadcast %154 : i32 to vector<64x1xi32>
    %156 = arith.cmpi slt, %1, %155 : vector<64x1xi32>
    %157 = arith.andi %153, %156 : vector<64x1xi1>
    %158 = vector.broadcast %147 : i32 to vector<1x128xi32>
    %159 = arith.cmpi sge, %4, %158 : vector<1x128xi32>
    %160 = arith.addi %147, %151 : i32
    %161 = vector.broadcast %160 : i32 to vector<1x128xi32>
    %162 = arith.cmpi slt, %4, %161 : vector<1x128xi32>
    %163 = arith.andi %159, %162 : vector<1x128xi1>
    %164 = vector.broadcast %157 : vector<64x1xi1> to vector<64x128xi1>
    %165 = vector.broadcast %163 : vector<1x128xi1> to vector<64x128xi1>
    %166 = arith.andi %164, %165 : vector<64x128xi1>
    %167 = arith.ori %135, %166 : vector<64x128xi1>
    %c0 = arith.constant 0 : index
    %c0_35 = arith.constant 0 : index
    %c0_36 = arith.constant 0 : index
    %168 = vector.load %arg3[%c0, %c0_35, %c0_36] : memref<2x64x128xf32, #tpu.memory_space<vmem>>, vector<1x64x128xf32>
    %169 = vector.shape_cast %168 : vector<1x64x128xf32> to vector<64x128xf32>
    %cst = arith.constant 0.000000e+00 : f32
    %170 = vector.broadcast %cst : f32 to vector<64x128xf32>
    %171 = arith.select %167, %170, %169 : vector<64x128xi1>, vector<64x128xf32>
    %c0_37 = arith.constant 0 : index
    %c0_38 = arith.constant 0 : index
    %c0_39 = arith.constant 0 : index
    %172 = vector.load %arg4[%c0_37, %c0_38, %c0_39] : memref<2x64x128xf32, #tpu.memory_space<vmem>>, vector<1x64x128xf32>
    %173 = vector.shape_cast %172 : vector<1x64x128xf32> to vector<64x128xf32>
    %174 = vector.shape_cast %171 : vector<64x128xf32> to vector<1x64x128xf32>
    tpu.vector_store %arg4[%c0_37, %c0_38, %c0_39], %174 {strides = array<i32>} : memref<2x64x128xf32, #tpu.memory_space<vmem>>, vector<1x64x128xf32>,
    %c2_i32_40 = arith.constant 2 : i32
    %175 = arith.muli %arg0, %c2_i32_40 : i32
    %c1_i32_41 = arith.constant 1 : i32
    %176 = arith.addi %175, %c1_i32_41 : i32
    %c1_i32_42 = arith.constant 1 : i32
    %177 = arith.minsi %176, %c1_i32_42 : i32
    %c20_i32_43 = arith.constant 20 : i32
    %178 = arith.muli %177, %c20_i32_43 : i32
    %c0_i32_44 = arith.constant 0 : i32
    %179 = arith.addi %178, %c0_i32_44 : i32
    %c0_i32_45 = arith.constant 0 : i32
    %180 = arith.addi %179, %c0_i32_45 : i32
    %181 = arith.index_cast %180 : i32 to index
    %182 = memref.load %arg2[%181] : memref<40xi32, #tpu.memory_space<smem>>
    %c0_i32_46 = arith.constant 0 : i32
    %183 = arith.addi %178, %c0_i32_46 : i32
    %c1_i32_47 = arith.constant 1 : i32
    %184 = arith.addi %183, %c1_i32_47 : i32
    %185 = arith.index_cast %184 : i32 to index
    %186 = memref.load %arg2[%185] : memref<40xi32, #tpu.memory_space<smem>>
    %c0_i32_48 = arith.constant 0 : i32
    %187 = arith.addi %178, %c0_i32_48 : i32
    %c2_i32_49 = arith.constant 2 : i32
    %188 = arith.addi %187, %c2_i32_49 : i32
    %189 = arith.index_cast %188 : i32 to index
    %190 = memref.load %arg2[%189] : memref<40xi32, #tpu.memory_space<smem>>
    %c0_i32_50 = arith.constant 0 : i32
    %191 = arith.addi %178, %c0_i32_50 : i32
    %c3_i32_51 = arith.constant 3 : i32
    %192 = arith.addi %191, %c3_i32_51 : i32
    %193 = arith.index_cast %192 : i32 to index
    %194 = memref.load %arg2[%193] : memref<40xi32, #tpu.memory_space<smem>>
    %195 = vector.broadcast %182 : i32 to vector<64x1xi32>
    %196 = arith.cmpi sge, %1, %195 : vector<64x1xi32>
    %197 = arith.addi %182, %186 : i32
    %198 = vector.broadcast %197 : i32 to vector<64x1xi32>
    %199 = arith.cmpi slt, %1, %198 : vector<64x1xi32>
    %200 = arith.andi %196, %199 : vector<64x1xi1>
    %201 = vector.broadcast %190 : i32 to vector<1x128xi32>
    %202 = arith.cmpi sge, %4, %201 : vector<1x128xi32>
    %203 = arith.addi %190, %194 : i32
    %204 = vector.broadcast %203 : i32 to vector<1x128xi32>
    %205 = arith.cmpi slt, %4, %204 : vector<1x128xi32>
    %206 = arith.andi %202, %205 : vector<1x128xi1>
    %207 = vector.broadcast %200 : vector<64x1xi1> to vector<64x128xi1>
    %208 = vector.broadcast %206 : vector<1x128xi1> to vector<64x128xi1>
    %209 = arith.andi %207, %208 : vector<64x128xi1>
    %c4_i32_52 = arith.constant 4 : i32
    %210 = arith.addi %178, %c4_i32_52 : i32
    %c0_i32_53 = arith.constant 0 : i32
    %211 = arith.addi %210, %c0_i32_53 : i32
    %212 = arith.index_cast %211 : i32 to index
    %213 = memref.load %arg2[%212] : memref<40xi32, #tpu.memory_space<smem>>
    %c4_i32_54 = arith.constant 4 : i32
    %214 = arith.addi %178, %c4_i32_54 : i32
    %c1_i32_55 = arith.constant 1 : i32
    %215 = arith.addi %214, %c1_i32_55 : i32
    %216 = arith.index_cast %215 : i32 to index
    %217 = memref.load %arg2[%216] : memref<40xi32, #tpu.memory_space<smem>>
    %c4_i32_56 = arith.constant 4 : i32
    %218 = arith.addi %178, %c4_i32_56 : i32
    %c2_i32_57 = arith.constant 2 : i32
    %219 = arith.addi %218, %c2_i32_57 : i32
    %220 = arith.index_cast %219 : i32 to index
    %221 = memref.load %arg2[%220] : memref<40xi32, #tpu.memory_space<smem>>
    %c4_i32_58 = arith.constant 4 : i32
    %222 = arith.addi %178, %c4_i32_58 : i32
    %c3_i32_59 = arith.constant 3 : i32
    %223 = arith.addi %222, %c3_i32_59 : i32
    %224 = arith.index_cast %223 : i32 to index
    %225 = memref.load %arg2[%224] : memref<40xi32, #tpu.memory_space<smem>>
    %226 = vector.broadcast %213 : i32 to vector<64x1xi32>
    %227 = arith.cmpi sge, %1, %226 : vector<64x1xi32>
    %228 = arith.addi %213, %217 : i32
    %229 = vector.broadcast %228 : i32 to vector<64x1xi32>
    %230 = arith.cmpi slt, %1, %229 : vector<64x1xi32>
    %231 = arith.andi %227, %230 : vector<64x1xi1>
    %232 = vector.broadcast %221 : i32 to vector<1x128xi32>
    %233 = arith.cmpi sge, %4, %232 : vector<1x128xi32>
    %234 = arith.addi %221, %225 : i32
    %235 = vector.broadcast %234 : i32 to vector<1x128xi32>
    %236 = arith.cmpi slt, %4, %235 : vector<1x128xi32>
    %237 = arith.andi %233, %236 : vector<1x128xi1>
    %238 = vector.broadcast %231 : vector<64x1xi1> to vector<64x128xi1>
    %239 = vector.broadcast %237 : vector<1x128xi1> to vector<64x128xi1>
    %240 = arith.andi %238, %239 : vector<64x128xi1>
    %241 = arith.ori %209, %240 : vector<64x128xi1>
    %c8_i32_60 = arith.constant 8 : i32
    %242 = arith.addi %178, %c8_i32_60 : i32
    %c0_i32_61 = arith.constant 0 : i32
    %243 = arith.addi %242, %c0_i32_61 : i32
    %244 = arith.index_cast %243 : i32 to index
    %245 = memref.load %arg2[%244] : memref<40xi32, #tpu.memory_space<smem>>
    %c8_i32_62 = arith.constant 8 : i32
    %246 = arith.addi %178, %c8_i32_62 : i32
    %c1_i32_63 = arith.constant 1 : i32
    %247 = arith.addi %246, %c1_i32_63 : i32
    %248 = arith.index_cast %247 : i32 to index
    %249 = memref.load %arg2[%248] : memref<40xi32, #tpu.memory_space<smem>>
    %c8_i32_64 = arith.constant 8 : i32
    %250 = arith.addi %178, %c8_i32_64 : i32
    %c2_i32_65 = arith.constant 2 : i32
    %251 = arith.addi %250, %c2_i32_65 : i32
    %252 = arith.index_cast %251 : i32 to index
    %253 = memref.load %arg2[%252] : memref<40xi32, #tpu.memory_space<smem>>
    %c8_i32_66 = arith.constant 8 : i32
    %254 = arith.addi %178, %c8_i32_66 : i32
    %c3_i32_67 = arith.constant 3 : i32
    %255 = arith.addi %254, %c3_i32_67 : i32
    %256 = arith.index_cast %255 : i32 to index
    %257 = memref.load %arg2[%256] : memref<40xi32, #tpu.memory_space<smem>>
    %258 = vector.broadcast %245 : i32 to vector<64x1xi32>
    %259 = arith.cmpi sge, %1, %258 : vector<64x1xi32>
    %260 = arith.addi %245, %249 : i32
    %261 = vector.broadcast %260 : i32 to vector<64x1xi32>
    %262 = arith.cmpi slt, %1, %261 : vector<64x1xi32>
    %263 = arith.andi %259, %262 : vector<64x1xi1>
    %264 = vector.broadcast %253 : i32 to vector<1x128xi32>
    %265 = arith.cmpi sge, %4, %264 : vector<1x128xi32>
    %266 = arith.addi %253, %257 : i32
    %267 = vector.broadcast %266 : i32 to vector<1x128xi32>
    %268 = arith.cmpi slt, %4, %267 : vector<1x128xi32>
    %269 = arith.andi %265, %268 : vector<1x128xi1>
    %270 = vector.broadcast %263 : vector<64x1xi1> to vector<64x128xi1>
    %271 = vector.broadcast %269 : vector<1x128xi1> to vector<64x128xi1>
    %272 = arith.andi %270, %271 : vector<64x128xi1>
    %273 = arith.ori %241, %272 : vector<64x128xi1>
    %c12_i32_68 = arith.constant 12 : i32
    %274 = arith.addi %178, %c12_i32_68 : i32
    %c0_i32_69 = arith.constant 0 : i32
    %275 = arith.addi %274, %c0_i32_69 : i32
    %276 = arith.index_cast %275 : i32 to index
    %277 = memref.load %arg2[%276] : memref<40xi32, #tpu.memory_space<smem>>
    %c12_i32_70 = arith.constant 12 : i32
    %278 = arith.addi %178, %c12_i32_70 : i32
    %c1_i32_71 = arith.constant 1 : i32
    %279 = arith.addi %278, %c1_i32_71 : i32
    %280 = arith.index_cast %279 : i32 to index
    %281 = memref.load %arg2[%280] : memref<40xi32, #tpu.memory_space<smem>>
    %c12_i32_72 = arith.constant 12 : i32
    %282 = arith.addi %178, %c12_i32_72 : i32
    %c2_i32_73 = arith.constant 2 : i32
    %283 = arith.addi %282, %c2_i32_73 : i32
    %284 = arith.index_cast %283 : i32 to index
    %285 = memref.load %arg2[%284] : memref<40xi32, #tpu.memory_space<smem>>
    %c12_i32_74 = arith.constant 12 : i32
    %286 = arith.addi %178, %c12_i32_74 : i32
    %c3_i32_75 = arith.constant 3 : i32
    %287 = arith.addi %286, %c3_i32_75 : i32
    %288 = arith.index_cast %287 : i32 to index
    %289 = memref.load %arg2[%288] : memref<40xi32, #tpu.memory_space<smem>>
    %290 = vector.broadcast %277 : i32 to vector<64x1xi32>
    %291 = arith.cmpi sge, %1, %290 : vector<64x1xi32>
    %292 = arith.addi %277, %281 : i32
    %293 = vector.broadcast %292 : i32 to vector<64x1xi32>
    %294 = arith.cmpi slt, %1, %293 : vector<64x1xi32>
    %295 = arith.andi %291, %294 : vector<64x1xi1>
    %296 = vector.broadcast %285 : i32 to vector<1x128xi32>
    %297 = arith.cmpi sge, %4, %296 : vector<1x128xi32>
    %298 = arith.addi %285, %289 : i32
    %299 = vector.broadcast %298 : i32 to vector<1x128xi32>
    %300 = arith.cmpi slt, %4, %299 : vector<1x128xi32>
    %301 = arith.andi %297, %300 : vector<1x128xi1>
    %302 = vector.broadcast %295 : vector<64x1xi1> to vector<64x128xi1>
    %303 = vector.broadcast %301 : vector<1x128xi1> to vector<64x128xi1>
    %304 = arith.andi %302, %303 : vector<64x128xi1>
    %305 = arith.ori %273, %304 : vector<64x128xi1>
    %c16_i32_76 = arith.constant 16 : i32
    %306 = arith.addi %178, %c16_i32_76 : i32
    %c0_i32_77 = arith.constant 0 : i32
    %307 = arith.addi %306, %c0_i32_77 : i32
    %308 = arith.index_cast %307 : i32 to index
    %309 = memref.load %arg2[%308] : memref<40xi32, #tpu.memory_space<smem>>
    %c16_i32_78 = arith.constant 16 : i32
    %310 = arith.addi %178, %c16_i32_78 : i32
    %c1_i32_79 = arith.constant 1 : i32
    %311 = arith.addi %310, %c1_i32_79 : i32
    %312 = arith.index_cast %311 : i32 to index
    %313 = memref.load %arg2[%312] : memref<40xi32, #tpu.memory_space<smem>>
    %c16_i32_80 = arith.constant 16 : i32
    %314 = arith.addi %178, %c16_i32_80 : i32
    %c2_i32_81 = arith.constant 2 : i32
    %315 = arith.addi %314, %c2_i32_81 : i32
    %316 = arith.index_cast %315 : i32 to index
    %317 = memref.load %arg2[%316] : memref<40xi32, #tpu.memory_space<smem>>
    %c16_i32_82 = arith.constant 16 : i32
    %318 = arith.addi %178, %c16_i32_82 : i32
    %c3_i32_83 = arith.constant 3 : i32
    %319 = arith.addi %318, %c3_i32_83 : i32
    %320 = arith.index_cast %319 : i32 to index
    %321 = memref.load %arg2[%320] : memref<40xi32, #tpu.memory_space<smem>>
    %322 = vector.broadcast %309 : i32 to vector<64x1xi32>
    %323 = arith.cmpi sge, %1, %322 : vector<64x1xi32>
    %324 = arith.addi %309, %313 : i32
    %325 = vector.broadcast %324 : i32 to vector<64x1xi32>
    %326 = arith.cmpi slt, %1, %325 : vector<64x1xi32>
    %327 = arith.andi %323, %326 : vector<64x1xi1>
    %328 = vector.broadcast %317 : i32 to vector<1x128xi32>
    %329 = arith.cmpi sge, %4, %328 : vector<1x128xi32>
    %330 = arith.addi %317, %321 : i32
    %331 = vector.broadcast %330 : i32 to vector<1x128xi32>
    %332 = arith.cmpi slt, %4, %331 : vector<1x128xi32>
    %333 = arith.andi %329, %332 : vector<1x128xi1>
    %334 = vector.broadcast %327 : vector<64x1xi1> to vector<64x128xi1>
    %335 = vector.broadcast %333 : vector<1x128xi1> to vector<64x128xi1>
    %336 = arith.andi %334, %335 : vector<64x128xi1>
    %337 = arith.ori %305, %336 : vector<64x128xi1>
    %c1 = arith.constant 1 : index
    %c0_84 = arith.constant 0 : index
    %c0_85 = arith.constant 0 : index
    %338 = vector.load %arg3[%c1, %c0_84, %c0_85] : memref<2x64x128xf32, #tpu.memory_space<vmem>>, vector<1x64x128xf32>
    %339 = vector.shape_cast %338 : vector<1x64x128xf32> to vector<64x128xf32>
    %cst_86 = arith.constant 0.000000e+00 : f32
    %340 = vector.broadcast %cst_86 : f32 to vector<64x128xf32>
    %341 = arith.select %337, %340, %339 : vector<64x128xi1>, vector<64x128xf32>
    %c1_87 = arith.constant 1 : index
    %c0_88 = arith.constant 0 : index
    %c0_89 = arith.constant 0 : index
    %342 = vector.load %arg4[%c1_87, %c0_88, %c0_89] : memref<2x64x128xf32, #tpu.memory_space<vmem>>, vector<1x64x128xf32>
    %343 = vector.shape_cast %342 : vector<1x64x128xf32> to vector<64x128xf32>
    %344 = vector.shape_cast %341 : vector<64x128xf32> to vector<1x64x128xf32>
    tpu.vector_store %arg4[%c1_87, %c0_88, %c0_89], %344 {strides = array<i32>} : memref<2x64x128xf32, #tpu.memory_space<vmem>>, vector<1x64x128xf32>,
    return
  }
  func.func @transform_0(%arg0: i32, %arg1: i32, %arg2: memref<40xi32, #tpu.memory_space<smem>>) -> (i32, i32, i32) {
    %c0_i32 = arith.constant 0 : i32
    %c0_i32_0 = arith.constant 0 : i32
    return %arg0, %c0_i32, %arg1 : i32, i32, i32
  }
  func.func @transform_1(%arg0: i32, %arg1: i32, %arg2: memref<40xi32, #tpu.memory_space<smem>>) -> (i32, i32, i32) {
    %c0_i32 = arith.constant 0 : i32
    %c0_i32_0 = arith.constant 0 : i32
    return %arg0, %c0_i32, %arg1 : i32, i32, i32
  }
}

</mosaic_0001>

<llo_original>
// kernel: tpu_custom_call.1
$region0: #{tpu_custom_call.1}
  #allocation0 [shape = 'u32[]', space=smem, size = 0x4, offset = 0x4, fixed_abs, tag = 'smem constant byte address 0x4 - core index']
  #allocation1 [shape = 'u32[144,128]{1,0:T(1,128)}', space=vmem, size = 0x12000, scoped, tag = 'internal scratch']
  #allocation2 [shape = 's32[1]{0}', space=sflag, size = 0x4, scoped, tag = 'scoped memory for tpu_custom_call.1']
  #allocation3 [shape = 'u8[512]{0}', space=smem, size = 0x200, scoped, tag = 'prefetched SMEM operand 0']
  %s0 = inlined_call_operand.vmem [shape: s32[40], index: 0, kind: input, shape index: {}]
  %s1 = inlined_call_operand.hbm [shape: f32[2,64,256], index: 1, kind: input, shape index: {}, may-alias: {1,2}]
  %s2 = inlined_call_operand.hbm [shape: f32[2,64,256], index: 2, kind: output, shape index: {}, may-alias: {1,2}]
  %s3 = sld [smem:[#allocation0]]
  $region41: #{tpu_custom_call.1} parent=0
    _
  %s5 = ssub.s32 1, %s3
  %s6 = scalar_select 0, %s5, %s3
  %s7 = sshll.u32 %s0, 4
  %s8 = int_to_ptr.vmem [resolvable:$true] %s7
  %10 = dma.vmem_to_smem %s8, 16, [#allocation3], [#allocation2]
  %11 = dma.done [#allocation2], 16
  %12 = sfence
  $region1: #{tpu_custom_call.1} parent=0
    #allocation4 [shape = 'u8[131072]{0}', space=vmem, size = 0x20000, scoped, tag = 'input window, operand 1']
    #allocation5 [shape = 's32[2]{0}', space=sflag, size = 0x8, scoped, tag = 'scoped memory for tpu_custom_call.1']
    #allocation6 [shape = 's32[2]{0}', space=sflag, size = 0x8, scoped, tag = 'scoped memory for tpu_custom_call.1']
    #allocation7 [shape = 'u8[131072]{0}', space=vmem, size = 0x20000, scoped, tag = 'output window, operand 0']
    %13 = vsyncpa [#allocation5], 0
    %s14 = scalar_lea.sflag [#allocation5], 1
    %15 = vsyncpa %s14, 0
    %16 = vsyncpa [#allocation6], 0
    %s17 = scalar_lea.sflag [#allocation6], 1
    %18 = vsyncpa %s17, 0
    loop: start=0, step=1, limit=4
    $region2: #{tpu_custom_call.1} parent=1 // loop_pre_header
      _
    $region3: #{tpu_custom_call.1} parent=1 // loop_header
      %s20 = sphi 0, %s24
      %p21 = scmp.ge.s32.totalorder %s20, 4
      %s27 = sphi 0, %s39
      %s28 = sphi 0, %s35
      %s29 = sphi 0, %s27
      %s30 = sphi 0, %s28
      %s31 = sphi 0, %s29
      %s32 = sphi 0, %s30
      %s44 = sphi 0, %s46
      %s47 = sphi 0, %s44
      %s48 = sphi 0, %s47
      %s64 = sphi 0, %s48
      %s72 = sphi 0, %s74
      %s75 = sphi 0, %s72
      %s76 = sphi 0, %s75
      %s92 = sphi 0, %s76
    $region4: #{tpu_custom_call.1} parent=1 // loop_header_branch
      %23 = sbr.rel (%p21) target = $region8
    $region5: #{tpu_custom_call.1} parent=1 // loop_body
      %s25 = ssub.s32 %s20, 1
      %s26 = ssub.s32 %s20, 2
      %s33 = sadd.s32 1, %s28
      %p34 = scmp.ge.s32.totalorder %s33, 2
      %s35 = scalar_select %p34, 0, %s33
      %s36 = sadd.s32 1, %s27
      %s37 = scalar_select %p34, %s36, %s27
      %p38 = scmp.ge.s32.totalorder %s37, 1
      %s39 = scalar_select %p38, 0, %s37
      %s40 = ssub.s32 %s27, %s39
      %s41 = ssub.s32 %s28, %s35
      %s42 = sor.u32 %s40, %s41
      %p43 = scmp.eq.s32.totalorder %s42, 0
      %s45 = sadd.s32 %s44, 1
      %s46 = scalar_select %p43, %s44, %s45
      %p49 = pneg %p43
      %p50 = scmp.eq.s32.totalorder %s20, 1
      %p51 = por %p49, %p50
      %p52 = scmp.ne.s32.totalorder %s44, %s47
      %p53 = scmp.eq.s32.totalorder %s20, 0
      %p54 = por %p52, %p53
      %p55 = scmp.ne.s32.totalorder %s44, %s47
      %p56 = scmp.eq.s32.totalorder %s25, 1
      %p57 = por %p55, %p56
      %p58 = scmp.ne.s32.totalorder %s47, %s48
      %p59 = scmp.eq.s32.totalorder %s25, 0
      %p60 = por %p58, %p59
      %p61 = scmp.ne.s32.totalorder %s47, %s48
      %p62 = scmp.eq.s32.totalorder %s26, 1
      %p63 = por %p61, %p62
      %p65 = scmp.ne.s32.totalorder %s48, %s64
      %p66 = scmp.eq.s32.totalorder %s26, 0
      %p67 = por %p65, %p66
      %s68 = ssub.s32 %s27, %s39
      %s69 = ssub.s32 %s28, %s35
      %s70 = sor.u32 %s68, %s69
      %p71 = scmp.eq.s32.totalorder %s70, 0
      %s73 = sadd.s32 %s72, 1
      %s74 = scalar_select %p71, %s72, %s73
      %p77 = pneg %p71
      %p78 = scmp.eq.s32.totalorder %s20, 1
      %p79 = por %p77, %p78
      %p80 = scmp.ne.s32.totalorder %s72, %s75
      %p81 = scmp.eq.s32.totalorder %s20, 0
      %p82 = por %p80, %p81
      %p83 = scmp.ne.s32.totalorder %s72, %s75
      %p84 = scmp.eq.s32.totalorder %s25, 1
      %p85 = por %p83, %p84
      %p86 = scmp.ne.s32.totalorder %s75, %s76
      %p87 = scmp.eq.s32.totalorder %s25, 0
      %p88 = por %p86, %p87
      %p89 = scmp.ne.s32.totalorder %s75, %s76
      %p90 = scmp.eq.s32.totalorder %s26, 1
      %p91 = por %p89, %p90
      %p93 = scmp.ne.s32.totalorder %s76, %s92
      %p94 = scmp.eq.s32.totalorder %s26, 0
      %p95 = por %p93, %p94
      %p96 = scmp.le.s32.totalorder 1, %s20
      %p97 = scmp.lt.s32.totalorder %s20, 3
      %p98 = pnand %p96, %p97
      %p99 = pneg %p98
      // Predicated region
      $region9: #{tpu_custom_call.1} parent=5 // pred_check
        _
      $region10: #{tpu_custom_call.1} parent=5 // pred_check_branch
        %101 = sbr.rel (%p98) target = $region12
      $region11: #{tpu_custom_call.1} parent=5 // pred_region
        %s102 = ssub.s32 %s20, 1
      $region12: #{tpu_custom_call.1} parent=5 // pred_fallthru
        _
      %p103 = scmp.lt.s32.totalorder %s20, 2
      // Predicated region
      $region13: #{tpu_custom_call.1} parent=5 // pred_check
        %p104 = pneg %p103
      $region14: #{tpu_custom_call.1} parent=5 // pred_check_branch
        %106 = sbr.rel (%p104) target = $region16
      $region15: #{tpu_custom_call.1} parent=5 // pred_region
        // Predicated region
        $region17: #{tpu_custom_call.1} parent=15 // pred_check
          %p107 = pneg %p54
        $region18: #{tpu_custom_call.1} parent=15 // pred_check_branch
          %109 = sbr.rel (%p107) target = $region20
        $region19: #{tpu_custom_call.1} parent=15 // pred_region
          %s110 = sand.u32 %s44, 1
          %s111 = scalar_lea.sflag [#allocation5], %s110
          %s112 = sand.u32 %s44, 1
          %s113 = smul.addr %s112, 128
          %s114 = scalar_lea.vmem [#allocation4], %s113
          %s115 = smul.u32 2, %s27
          %s117 = ssub.s32 2048, 2048
          %118 = vsyncadd %s111, %s117
          %s119 = smul.addr %s115, 16
          %s120 = sadd.s32 %s28, %s119
          %s121 = smul.addr %s120, 128
          %s122 = scalar_lea.hbm %s1, %s121
          %s123 = sshll.u32 %s114, 4
          %s124 = int_to_ptr.vmem [resolvable:$true] %s123
          %129 = dma.hbm_to_vmem [thread:$0]  %s122, 2048, %s124, %s111, 256, 128, 8
        $region20: #{tpu_custom_call.1} parent=15 // pred_fallthru
          _
      $region16: #{tpu_custom_call.1} parent=5 // pred_fallthru
        _
      %p130 = scmp.le.s32.totalorder 1, %s20
      %p131 = scmp.lt.s32.totalorder %s20, 3
      %p132 = pnand %p130, %p131
      %p133 = pneg %p132
      // Predicated region
      $region21: #{tpu_custom_call.1} parent=5 // pred_check
        _
      $region22: #{tpu_custom_call.1} parent=5 // pred_check_branch
        %135 = sbr.rel (%p132) target = $region24
      $region23: #{tpu_custom_call.1} parent=5 // pred_region
        %s136 = ssub.s32 %s20, 1
        %s137 = sand.u32 %s47, 1
        %s138 = scalar_lea.sflag [#allocation5], %s137
        %s139 = sand.u32 %s47, 1
        %s140 = smul.addr %s139, 128
        %s141 = scalar_lea.vmem [#allocation4], %s140
        // Predicated region
        $region25: #{tpu_custom_call.1} parent=23 // pred_check
          %p142 = pneg %p60
        $region26: #{tpu_custom_call.1} parent=23 // pred_check_branch
          %144 = sbr.rel (%p142) target = $region28
        $region27: #{tpu_custom_call.1} parent=23 // pred_region
          %145 = dma.done %s138, 2048
        $region28: #{tpu_custom_call.1} parent=23 // pred_fallthru
          _
        %s146 = sand.u32 %s47, 1
        %s147 = scalar_lea.sflag [#allocation5], %s146
        %s148 = sand.u32 %s47, 1
        %s149 = smul.addr %s148, 128
        %s150 = scalar_lea.vmem [#allocation4], %s149
        %p151 = pneg %p60
        %p152 = pneg %p57
        %p153 = pneg %p88
        %p154 = pneg %p85
        %s155 = sand.u32 %s75, 1
        %s156 = scalar_lea.sflag [#allocation6], %s155
        %s157 = sand.u32 %s75, 1
        %s158 = smul.addr %s157, 128
        %s159 = scalar_lea.vmem [#allocation7], %s158
        %s160 = smul.u32 2, %s29
        %s161 = smul.u32 2, %s29
        %s162 = smul.u32 %s30, 128
        %v163 = vlaneseq
        %v164 = vshrl.u32 %v163, 7
        %v165 = vadd.s32 %v164, 8
        %v166 = vadd.s32 %v164, 16
        %v167 = vadd.s32 %v164, 24
        %v168 = vadd.s32 %v164, 32
        %v169 = vadd.s32 %v164, 40
        %v170 = vadd.s32 %v164, 48
        %v171 = vadd.s32 %v164, 56
        %v172 = vlaneseq
        %v173 = vand.u32 %v172, 127
        %v174 = vstv %s162
        %v175 = vadd.s32 %v173, %v174
        %s176 = smul.u32 %s29, 2
        %p177 = scmp.lt.s32.totalorder %s176, 1
        %s178 = scalar_select %p177, %s176, 1
        %s179 = smul.u32 %s178, 20
        %s180 = sld [smem:[#allocation3 + %s179]]
        %s181 = sadd.s32 %s179, 1
        %s182 = sld [smem:[#allocation3 + %s181]]
        %s183 = sadd.s32 %s179, 2
        %s184 = sld [smem:[#allocation3 + %s183]]
        %s185 = sadd.s32 %s179, 3
        %s186 = sld [smem:[#allocation3 + %s185]]
        %v187 = vstv %s180
        %vm188 = vcmp.ge.s32.totalorder %v164, %v187
        %vm189 = vcmp.ge.s32.totalorder %v165, %v187
        %vm190 = vcmp.ge.s32.totalorder %v166, %v187
        %vm191 = vcmp.ge.s32.totalorder %v167, %v187
        %vm192 = vcmp.ge.s32.totalorder %v168, %v187
        %vm193 = vcmp.ge.s32.totalorder %v169, %v187
        %vm194 = vcmp.ge.s32.totalorder %v170, %v187
        %vm195 = vcmp.ge.s32.totalorder %v171, %v187
        %s196 = sadd.s32 %s180, %s182
        %v197 = vstv %s196
        %vm198 = vcmp.lt.s32.totalorder %v164, %v197
        %vm199 = vcmp.lt.s32.totalorder %v165, %v197
        %vm200 = vcmp.lt.s32.totalorder %v166, %v197
        %vm201 = vcmp.lt.s32.totalorder %v167, %v197
        %vm202 = vcmp.lt.s32.totalorder %v168, %v197
        %vm203 = vcmp.lt.s32.totalorder %v169, %v197
        %vm204 = vcmp.lt.s32.totalorder %v170, %v197
        %vm205 = vcmp.lt.s32.totalorder %v171, %v197
        %vm206 = vmand %vm188, %vm198
        %vm207 = vmand %vm189, %vm199
        %vm208 = vmand %vm190, %vm200
        %vm209 = vmand %vm191, %vm201
        %vm210 = vmand %vm192, %vm202
        %vm211 = vmand %vm193, %vm203
        %vm212 = vmand %vm194, %vm204
        %vm213 = vmand %vm195, %vm205
        %v214 = vstv %s184
        %vm215 = vcmp.ge.s32.totalorder %v175, %v214
        %s216 = sadd.s32 %s184, %s186
        %v217 = vstv %s216
        %vm218 = vcmp.lt.s32.totalorder %v175, %v217
        %vm219 = vmand %vm215, %vm218
        %v220 = vsel %vm206, 1, 0
        %v221 = vsel %vm207, 1, 0
        %v222 = vsel %vm208, 1, 0
        %v223 = vsel %vm209, 1, 0
        %v224 = vsel %vm210, 1, 0
        %v225 = vsel %vm211, 1, 0
        %v226 = vsel %vm212, 1, 0
        %v227 = vsel %vm213, 1, 0
        %vm228 = vcmp.eq.s32.totalorder %v220, 1
        %vm229 = vcmp.eq.s32.totalorder %v221, 1
        %vm230 = vcmp.eq.s32.totalorder %v222, 1
        %vm231 = vcmp.eq.s32.totalorder %v223, 1
        %vm232 = vcmp.eq.s32.totalorder %v224, 1
        %vm233 = vcmp.eq.s32.totalorder %v225, 1
        %vm234 = vcmp.eq.s32.totalorder %v226, 1
        %vm235 = vcmp.eq.s32.totalorder %v227, 1
        %v236 = vsel %vm219, 1, 0
        %vm237 = vcmp.eq.s32.totalorder %v236, 1
        %vm238 = vmand %vm228, %vm237
        %vm239 = vmand %vm229, %vm237
        %vm240 = vmand %vm230, %vm237
        %vm241 = vmand %vm231, %vm237
        %vm242 = vmand %vm232, %vm237
        %vm243 = vmand %vm233, %vm237
        %vm244 = vmand %vm234, %vm237
        %vm245 = vmand %vm235, %vm237
        %s246 = sadd.s32 %s179, 4
        %s247 = sld [smem:[#allocation3 + %s246]]
        %s248 = sadd.s32 %s179, 5
        %s249 = sld [smem:[#allocation3 + %s248]]
        %s250 = sadd.s32 %s179, 6
        %s251 = sld [smem:[#allocation3 + %s250]]
        %s252 = sadd.s32 %s179, 7
        %s253 = sld [smem:[#allocation3 + %s252]]
        %v254 = vstv %s247
        %vm255 = vcmp.ge.s32.totalorder %v164, %v254
        %vm256 = vcmp.ge.s32.totalorder %v165, %v254
        %vm257 = vcmp.ge.s32.totalorder %v166, %v254
        %vm258 = vcmp.ge.s32.totalorder %v167, %v254
        %vm259 = vcmp.ge.s32.totalorder %v168, %v254
        %vm260 = vcmp.ge.s32.totalorder %v169, %v254
        %vm261 = vcmp.ge.s32.totalorder %v170, %v254
        %vm262 = vcmp.ge.s32.totalorder %v171, %v254
        %s263 = sadd.s32 %s247, %s249
        %v264 = vstv %s263
        %vm265 = vcmp.lt.s32.totalorder %v164, %v264
        %vm266 = vcmp.lt.s32.totalorder %v165, %v264
        %vm267 = vcmp.lt.s32.totalorder %v166, %v264
        %vm268 = vcmp.lt.s32.totalorder %v167, %v264
        %vm269 = vcmp.lt.s32.totalorder %v168, %v264
        %vm270 = vcmp.lt.s32.totalorder %v169, %v264
        %vm271 = vcmp.lt.s32.totalorder %v170, %v264
        %vm272 = vcmp.lt.s32.totalorder %v171, %v264
        %vm273 = vmand %vm255, %vm265
        %vm274 = vmand %vm256, %vm266
        %vm275 = vmand %vm257, %vm267
        %vm276 = vmand %vm258, %vm268
        %vm277 = vmand %vm259, %vm269
        %vm278 = vmand %vm260, %vm270
        %vm279 = vmand %vm261, %vm271
        %vm280 = vmand %vm262, %vm272
        %v281 = vstv %s251
        %vm282 = vcmp.ge.s32.totalorder %v175, %v281
        %s283 = sadd.s32 %s251, %s253
        %v284 = vstv %s283
        %vm285 = vcmp.lt.s32.totalorder %v175, %v284
        %vm286 = vmand %vm282, %vm285
        %v287 = vsel %vm273, 1, 0
        %v288 = vsel %vm274, 1, 0
        %v289 = vsel %vm275, 1, 0
        %v290 = vsel %vm276, 1, 0
        %v291 = vsel %vm277, 1, 0
        %v292 = vsel %vm278, 1, 0
        %v293 = vsel %vm279, 1, 0
        %v294 = vsel %vm280, 1, 0
        %vm295 = vcmp.eq.s32.totalorder %v287, 1
        %vm296 = vcmp.eq.s32.totalorder %v288, 1
        %vm297 = vcmp.eq.s32.totalorder %v289, 1
        %vm298 = vcmp.eq.s32.totalorder %v290, 1
        %vm299 = vcmp.eq.s32.totalorder %v291, 1
        %vm300 = vcmp.eq.s32.totalorder %v292, 1
        %vm301 = vcmp.eq.s32.totalorder %v293, 1
        %vm302 = vcmp.eq.s32.totalorder %v294, 1
        %v303 = vsel %vm286, 1, 0
        %vm304 = vcmp.eq.s32.totalorder %v303, 1
        %vm305 = vmand %vm295, %vm304
        %vm306 = vmand %vm296, %vm304
        %vm307 = vmand %vm297, %vm304
        %vm308 = vmand %vm298, %vm304
        %vm309 = vmand %vm299, %vm304
        %vm310 = vmand %vm300, %vm304
        %vm311 = vmand %vm301, %vm304
        %vm312 = vmand %vm302, %vm304
        %vm313 = vmor %vm238, %vm305
        %vm314 = vmor %vm239, %vm306
        %vm315 = vmor %vm240, %vm307
        %vm316 = vmor %vm241, %vm308
        %vm317 = vmor %vm242, %vm309
        %vm318 = vmor %vm243, %vm310
        %vm319 = vmor %vm244, %vm311
        %vm320 = vmor %vm245, %vm312
        %s321 = sadd.s32 %s179, 8
        %s322 = sld [smem:[#allocation3 + %s321]]
        %s323 = sadd.s32 %s179, 9
        %s324 = sld [smem:[#allocation3 + %s323]]
        %s325 = sadd.s32 %s179, 10
        %s326 = sld [smem:[#allocation3 + %s325]]
        %s327 = sadd.s32 %s179, 11
        %s328 = sld [smem:[#allocation3 + %s327]]
        %v329 = vstv %s322
        %vm330 = vcmp.ge.s32.totalorder %v164, %v329
        %vm331 = vcmp.ge.s32.totalorder %v165, %v329
        %vm332 = vcmp.ge.s32.totalorder %v166, %v329
        %vm333 = vcmp.ge.s32.totalorder %v167, %v329
        %vm334 = vcmp.ge.s32.totalorder %v168, %v329
        %vm335 = vcmp.ge.s32.totalorder %v169, %v329
        %vm336 = vcmp.ge.s32.totalorder %v170, %v329
        %vm337 = vcmp.ge.s32.totalorder %v171, %v329
        %s338 = sadd.s32 %s322, %s324
        %v339 = vstv %s338
        %vm340 = vcmp.lt.s32.totalorder %v164, %v339
        %vm341 = vcmp.lt.s32.totalorder %v165, %v339
        %vm342 = vcmp.lt.s32.totalorder %v166, %v339
        %vm343 = vcmp.lt.s32.totalorder %v167, %v339
        %vm344 = vcmp.lt.s32.totalorder %v168, %v339
        %vm345 = vcmp.lt.s32.totalorder %v169, %v339
        %vm346 = vcmp.lt.s32.totalorder %v170, %v339
        %vm347 = vcmp.lt.s32.totalorder %v171, %v339
        %vm348 = vmand %vm330, %vm340
        %vm349 = vmand %vm331, %vm341
        %vm350 = vmand %vm332, %vm342
        %vm351 = vmand %vm333, %vm343
        %vm352 = vmand %vm334, %vm344
        %vm353 = vmand %vm335, %vm345
        %vm354 = vmand %vm336, %vm346
        %vm355 = vmand %vm337, %vm347
        %v356 = vstv %s326
        %vm357 = vcmp.ge.s32.totalorder %v175, %v356
        %s358 = sadd.s32 %s326, %s328
        %v359 = vstv %s358
        %vm360 = vcmp.lt.s32.totalorder %v175, %v359
        %vm361 = vmand %vm357, %vm360
        %v362 = vsel %vm348, 1, 0
        %v363 = vsel %vm349, 1, 0
        %v364 = vsel %vm350, 1, 0
        %v365 = vsel %vm351, 1, 0
        %v366 = vsel %vm352, 1, 0
        %v367 = vsel %vm353, 1, 0
        %v368 = vsel %vm354, 1, 0
        %v369 = vsel %vm355, 1, 0
        %vm370 = vcmp.eq.s32.totalorder %v362, 1
        %vm371 = vcmp.eq.s32.totalorder %v363, 1
        %vm372 = vcmp.eq.s32.totalorder %v364, 1
        %vm373 = vcmp.eq.s32.totalorder %v365, 1
        %vm374 = vcmp.eq.s32.totalorder %v366, 1
        %vm375 = vcmp.eq.s32.totalorder %v367, 1
        %vm376 = vcmp.eq.s32.totalorder %v368, 1
        %vm377 = vcmp.eq.s32.totalorder %v369, 1
        %v378 = vsel %vm361, 1, 0
        %vm379 = vcmp.eq.s32.totalorder %v378, 1
        %vm380 = vmand %vm370, %vm379
        %vm381 = vmand %vm371, %vm379
        %vm382 = vmand %vm372, %vm379
        %vm383 = vmand %vm373, %vm379
        %vm384 = vmand %vm374, %vm379
        %vm385 = vmand %vm375, %vm379
        %vm386 = vmand %vm376, %vm379
        %vm387 = vmand %vm377, %vm379
        %vm388 = vmor %vm313, %vm380
        %vm389 = vmor %vm314, %vm381
        %vm390 = vmor %vm315, %vm382
        %vm391 = vmor %vm316, %vm383
        %vm392 = vmor %vm317, %vm384
        %vm393 = vmor %vm318, %vm385
        %vm394 = vmor %vm319, %vm386
        %vm395 = vmor %vm320, %vm387
        %s396 = sadd.s32 %s179, 12
        %s397 = sld [smem:[#allocation3 + %s396]]
        %s398 = sadd.s32 %s179, 13
        %s399 = sld [smem:[#allocation3 + %s398]]
        %s400 = sadd.s32 %s179, 14
        %s401 = sld [smem:[#allocation3 + %s400]]
        %s402 = sadd.s32 %s179, 15
        %s403 = sld [smem:[#allocation3 + %s402]]
        %v404 = vstv %s397
        %vm405 = vcmp.ge.s32.totalorder %v164, %v404
        %vm406 = vcmp.ge.s32.totalorder %v165, %v404
        %vm407 = vcmp.ge.s32.totalorder %v166, %v404
        %vm408 = vcmp.ge.s32.totalorder %v167, %v404
        %vm409 = vcmp.ge.s32.totalorder %v168, %v404
        %vm410 = vcmp.ge.s32.totalorder %v169, %v404
        %vm411 = vcmp.ge.s32.totalorder %v170, %v404
        %vm412 = vcmp.ge.s32.totalorder %v171, %v404
        %s413 = sadd.s32 %s397, %s399
        %v414 = vstv %s413
        %vm415 = vcmp.lt.s32.totalorder %v164, %v414
        %vm416 = vcmp.lt.s32.totalorder %v165, %v414
        %vm417 = vcmp.lt.s32.totalorder %v166, %v414
        %vm418 = vcmp.lt.s32.totalorder %v167, %v414
        %vm419 = vcmp.lt.s32.totalorder %v168, %v414
        %vm420 = vcmp.lt.s32.totalorder %v169, %v414
        %vm421 = vcmp.lt.s32.totalorder %v170, %v414
        %vm422 = vcmp.lt.s32.totalorder %v171, %v414
        %vm423 = vmand %vm405, %vm415
        %vm424 = vmand %vm406, %vm416
        %vm425 = vmand %vm407, %vm417
        %vm426 = vmand %vm408, %vm418
        %vm427 = vmand %vm409, %vm419
        %vm428 = vmand %vm410, %vm420
        %vm429 = vmand %vm411, %vm421
        %vm430 = vmand %vm412, %vm422
        %v431 = vstv %s401
        %vm432 = vcmp.ge.s32.totalorder %v175, %v431
        %s433 = sadd.s32 %s401, %s403
        %v434 = vstv %s433
        %vm435 = vcmp.lt.s32.totalorder %v175, %v434
        %vm436 = vmand %vm432, %vm435
        %v437 = vsel %vm423, 1, 0
        %v438 = vsel %vm424, 1, 0
        %v439 = vsel %vm425, 1, 0
        %v440 = vsel %vm426, 1, 0
        %v441 = vsel %vm427, 1, 0
        %v442 = vsel %vm428, 1, 0
        %v443 = vsel %vm429, 1, 0
        %v444 = vsel %vm430, 1, 0
        %vm445 = vcmp.eq.s32.totalorder %v437, 1
        %vm446 = vcmp.eq.s32.totalorder %v438, 1
        %vm447 = vcmp.eq.s32.totalorder %v439, 1
        %vm448 = vcmp.eq.s32.totalorder %v440, 1
        %vm449 = vcmp.eq.s32.totalorder %v441, 1
        %vm450 = vcmp.eq.s32.totalorder %v442, 1
        %vm451 = vcmp.eq.s32.totalorder %v443, 1
        %vm452 = vcmp.eq.s32.totalorder %v444, 1
        %v453 = vsel %vm436, 1, 0
        %vm454 = vcmp.eq.s32.totalorder %v453, 1
        %vm455 = vmand %vm445, %vm454
        %vm456 = vmand %vm446, %vm454
        %vm457 = vmand %vm447, %vm454
        %vm458 = vmand %vm448, %vm454
        %vm459 = vmand %vm449, %vm454
        %vm460 = vmand %vm450, %vm454
        %vm461 = vmand %vm451, %vm454
        %vm462 = vmand %vm452, %vm454
        %vm463 = vmor %vm388, %vm455
        %vm464 = vmor %vm389, %vm456
        %vm465 = vmor %vm390, %vm457
        %vm466 = vmor %vm391, %vm458
        %vm467 = vmor %vm392, %vm459
        %vm468 = vmor %vm393, %vm460
        %vm469 = vmor %vm394, %vm461
        %vm470 = vmor %vm395, %vm462
        %s471 = sadd.s32 %s179, 16
        %s472 = sld [smem:[#allocation3 + %s471]]
        %s473 = sadd.s32 %s179, 17
        %s474 = sld [smem:[#allocation3 + %s473]]
        %s475 = sadd.s32 %s179, 18
        %s476 = sld [smem:[#allocation3 + %s475]]
        %s477 = sadd.s32 %s179, 19
        %s478 = sld [smem:[#allocation3 + %s477]]
        %v479 = vstv %s472
        %vm480 = vcmp.ge.s32.totalorder %v164, %v479
        %vm481 = vcmp.ge.s32.totalorder %v165, %v479
        %vm482 = vcmp.ge.s32.totalorder %v166, %v479
        %vm483 = vcmp.ge.s32.totalorder %v167, %v479
        %vm484 = vcmp.ge.s32.totalorder %v168, %v479
        %vm485 = vcmp.ge.s32.totalorder %v169, %v479
        %vm486 = vcmp.ge.s32.totalorder %v170, %v479
        %vm487 = vcmp.ge.s32.totalorder %v171, %v479
        %s488 = sadd.s32 %s472, %s474
        %v489 = vstv %s488
        %vm490 = vcmp.lt.s32.totalorder %v164, %v489
        %vm491 = vcmp.lt.s32.totalorder %v165, %v489
        %vm492 = vcmp.lt.s32.totalorder %v166, %v489
        %vm493 = vcmp.lt.s32.totalorder %v167, %v489
        %vm494 = vcmp.lt.s32.totalorder %v168, %v489
        %vm495 = vcmp.lt.s32.totalorder %v169, %v489
        %vm496 = vcmp.lt.s32.totalorder %v170, %v489
        %vm497 = vcmp.lt.s32.totalorder %v171, %v489
        %vm498 = vmand %vm480, %vm490
        %vm499 = vmand %vm481, %vm491
        %vm500 = vmand %vm482, %vm492
        %vm501 = vmand %vm483, %vm493
        %vm502 = vmand %vm484, %vm494
        %vm503 = vmand %vm485, %vm495
        %vm504 = vmand %vm486, %vm496
        %vm505 = vmand %vm487, %vm497
        %v506 = vstv %s476
        %vm507 = vcmp.ge.s32.totalorder %v175, %v506
        %s508 = sadd.s32 %s476, %s478
        %v509 = vstv %s508
        %vm510 = vcmp.lt.s32.totalorder %v175, %v509
        %vm511 = vmand %vm507, %vm510
        %v512 = vsel %vm498, 1, 0
        %v513 = vsel %vm499, 1, 0
        %v514 = vsel %vm500, 1, 0
        %v515 = vsel %vm501, 1, 0
        %v516 = vsel %vm502, 1, 0
        %v517 = vsel %vm503, 1, 0
        %v518 = vsel %vm504, 1, 0
        %v519 = vsel %vm505, 1, 0
        %vm520 = vcmp.eq.s32.totalorder %v512, 1
        %vm521 = vcmp.eq.s32.totalorder %v513, 1
        %vm522 = vcmp.eq.s32.totalorder %v514, 1
        %vm523 = vcmp.eq.s32.totalorder %v515, 1
        %vm524 = vcmp.eq.s32.totalorder %v516, 1
        %vm525 = vcmp.eq.s32.totalorder %v517, 1
        %vm526 = vcmp.eq.s32.totalorder %v518, 1
        %vm527 = vcmp.eq.s32.totalorder %v519, 1
        %v528 = vsel %vm511, 1, 0
        %vm529 = vcmp.eq.s32.totalorder %v528, 1
        %vm530 = vmand %vm520, %vm529
        %vm531 = vmand %vm521, %vm529
        %vm532 = vmand %vm522, %vm529
        %vm533 = vmand %vm523, %vm529
        %vm534 = vmand %vm524, %vm529
        %vm535 = vmand %vm525, %vm529
        %vm536 = vmand %vm526, %vm529
        %vm537 = vmand %vm527, %vm529
        %vm538 = vmor %vm463, %vm530
        %vm539 = vmor %vm464, %vm531
        %vm540 = vmor %vm465, %vm532
        %vm541 = vmor %vm466, %vm533
        %vm542 = vmor %vm467, %vm534
        %vm543 = vmor %vm468, %vm535
        %vm544 = vmor %vm469, %vm536
        %vm545 = vmor %vm470, %vm537
        %v546 = vld [vmem:[%s141] sm:$0xff]
        %v547 = vld [vmem:[%s141 + $0x8] sm:$0xff]
        %v548 = vld [vmem:[%s141 + $0x10] sm:$0xff]
        %v549 = vld [vmem:[%s141 + $0x18] sm:$0xff]
        %v550 = vld [vmem:[%s141 + $0x20] sm:$0xff]
        %v551 = vld [vmem:[%s141 + $0x28] sm:$0xff]
        %v552 = vld [vmem:[%s141 + $0x30] sm:$0xff]
        %v553 = vld [vmem:[%s141 + $0x38] sm:$0xff]
        %v554 = vsel %vm538, 0.0, %v546
        %v555 = vsel %vm539, 0.0, %v547
        %v556 = vsel %vm540, 0.0, %v548
        %v557 = vsel %vm541, 0.0, %v549
        %v558 = vsel %vm542, 0.0, %v550
        %v559 = vsel %vm543, 0.0, %v551
        %v560 = vsel %vm544, 0.0, %v552
        %v561 = vsel %vm545, 0.0, %v553
        %562 = vst [vmem:[%s159] sm:$0xff] %v554
        %563 = vst [vmem:[%s159 + $0x8] sm:$0xff] %v555
        %564 = vst [vmem:[%s159 + $0x10] sm:$0xff] %v556
        %565 = vst [vmem:[%s159 + $0x18] sm:$0xff] %v557
        %566 = vst [vmem:[%s159 + $0x20] sm:$0xff] %v558
        %567 = vst [vmem:[%s159 + $0x28] sm:$0xff] %v559
        %568 = vst [vmem:[%s159 + $0x30] sm:$0xff] %v560
        %569 = vst [vmem:[%s159 + $0x38] sm:$0xff] %v561
        %s570 = sadd.s32 %s176, 1
        %p571 = scmp.lt.s32.totalorder %s570, 1
        %s572 = scalar_select %p571, %s570, 1
        %s573 = smul.u32 %s572, 20
        %s574 = sld [smem:[#allocation3 + %s573]]
        %s575 = sadd.s32 %s573, 1
        %s576 = sld [smem:[#allocation3 + %s575]]
        %s577 = sadd.s32 %s573, 2
        %s578 = sld [smem:[#allocation3 + %s577]]
        %s579 = sadd.s32 %s573, 3
        %s580 = sld [smem:[#allocation3 + %s579]]
        %v581 = vstv %s574
        %vm582 = vcmp.ge.s32.totalorder %v164, %v581
        %vm583 = vcmp.ge.s32.totalorder %v165, %v581
        %vm584 = vcmp.ge.s32.totalorder %v166, %v581
        %vm585 = vcmp.ge.s32.totalorder %v167, %v581
        %vm586 = vcmp.ge.s32.totalorder %v168, %v581
        %vm587 = vcmp.ge.s32.totalorder %v169, %v581
        %vm588 = vcmp.ge.s32.totalorder %v170, %v581
        %vm589 = vcmp.ge.s32.totalorder %v171, %v581
        %s590 = sadd.s32 %s574, %s576
        %v591 = vstv %s590
        %vm592 = vcmp.lt.s32.totalorder %v164, %v591
        %vm593 = vcmp.lt.s32.totalorder %v165, %v591
        %vm594 = vcmp.lt.s32.totalorder %v166, %v591
        %vm595 = vcmp.lt.s32.totalorder %v167, %v591
        %vm596 = vcmp.lt.s32.totalorder %v168, %v591
        %vm597 = vcmp.lt.s32.totalorder %v169, %v591
        %vm598 = vcmp.lt.s32.totalorder %v170, %v591
        %vm599 = vcmp.lt.s32.totalorder %v171, %v591
        %vm600 = vmand %vm582, %vm592
        %vm601 = vmand %vm583, %vm593
        %vm602 = vmand %vm584, %vm594
        %vm603 = vmand %vm585, %vm595
        %vm604 = vmand %vm586, %vm596
        %vm605 = vmand %vm587, %vm597
        %vm606 = vmand %vm588, %vm598
        %vm607 = vmand %vm589, %vm599
        %v608 = vstv %s578
        %vm609 = vcmp.ge.s32.totalorder %v175, %v608
        %s610 = sadd.s32 %s578, %s580
        %v611 = vstv %s610
        %vm612 = vcmp.lt.s32.totalorder %v175, %v611
        %vm613 = vmand %vm609, %vm612
        %v614 = vsel %vm600, 1, 0
        %v615 = vsel %vm601, 1, 0
        %v616 = vsel %vm602, 1, 0
        %v617 = vsel %vm603, 1, 0
        %v618 = vsel %vm604, 1, 0
        %v619 = vsel %vm605, 1, 0
        %v620 = vsel %vm606, 1, 0
        %v621 = vsel %vm607, 1, 0
        %vm622 = vcmp.eq.s32.totalorder %v614, 1
        %vm623 = vcmp.eq.s32.totalorder %v615, 1
        %vm624 = vcmp.eq.s32.totalorder %v616, 1
        %vm625 = vcmp.eq.s32.totalorder %v617, 1
        %vm626 = vcmp.eq.s32.totalorder %v618, 1
        %vm627 = vcmp.eq.s32.totalorder %v619, 1
        %vm628 = vcmp.eq.s32.totalorder %v620, 1
        %vm629 = vcmp.eq.s32.totalorder %v621, 1
        %v630 = vsel %vm613, 1, 0
        %vm631 = vcmp.eq.s32.totalorder %v630, 1
        %vm632 = vmand %vm622, %vm631
        %vm633 = vmand %vm623, %vm631
        %vm634 = vmand %vm624, %vm631
        %vm635 = vmand %vm625, %vm631
        %vm636 = vmand %vm626, %vm631
        %vm637 = vmand %vm627, %vm631
        %vm638 = vmand %vm628, %vm631
        %vm639 = vmand %vm629, %vm631
        %s640 = sadd.s32 %s573, 4
        %s641 = sld [smem:[#allocation3 + %s640]]
        %s642 = sadd.s32 %s573, 5
        %s643 = sld [smem:[#allocation3 + %s642]]
        %s644 = sadd.s32 %s573, 6
        %s645 = sld [smem:[#allocation3 + %s644]]
        %s646 = sadd.s32 %s573, 7
        %s647 = sld [smem:[#allocation3 + %s646]]
        %v648 = vstv %s641
        %vm649 = vcmp.ge.s32.totalorder %v164, %v648
        %vm650 = vcmp.ge.s32.totalorder %v165, %v648
        %vm651 = vcmp.ge.s32.totalorder %v166, %v648
        %vm652 = vcmp.ge.s32.totalorder %v167, %v648
        %vm653 = vcmp.ge.s32.totalorder %v168, %v648
        %vm654 = vcmp.ge.s32.totalorder %v169, %v648
        %vm655 = vcmp.ge.s32.totalorder %v170, %v648
        %vm656 = vcmp.ge.s32.totalorder %v171, %v648
        %s657 = sadd.s32 %s641, %s643
        %v658 = vstv %s657
        %vm659 = vcmp.lt.s32.totalorder %v164, %v658
        %vm660 = vcmp.lt.s32.totalorder %v165, %v658
        %vm661 = vcmp.lt.s32.totalorder %v166, %v658
        %vm662 = vcmp.lt.s32.totalorder %v167, %v658
        %vm663 = vcmp.lt.s32.totalorder %v168, %v658
        %vm664 = vcmp.lt.s32.totalorder %v169, %v658
        %vm665 = vcmp.lt.s32.totalorder %v170, %v658
        %vm666 = vcmp.lt.s32.totalorder %v171, %v658
        %vm667 = vmand %vm649, %vm659
        %vm668 = vmand %vm650, %vm660
        %vm669 = vmand %vm651, %vm661
        %vm670 = vmand %vm652, %vm662
        %vm671 = vmand %vm653, %vm663
        %vm672 = vmand %vm654, %vm664
        %vm673 = vmand %vm655, %vm665
        %vm674 = vmand %vm656, %vm666
        %v675 = vstv %s645
        %vm676 = vcmp.ge.s32.totalorder %v175, %v675
        %s677 = sadd.s32 %s645, %s647
        %v678 = vstv %s677
        %vm679 = vcmp.lt.s32.totalorder %v175, %v678
        %vm680 = vmand %vm676, %vm679
        %v681 = vsel %vm667, 1, 0
        %v682 = vsel %vm668, 1, 0
        %v683 = vsel %vm669, 1, 0
        %v684 = vsel %vm670, 1, 0
        %v685 = vsel %vm671, 1, 0
        %v686 = vsel %vm672, 1, 0
        %v687 = vsel %vm673, 1, 0
        %v688 = vsel %vm674, 1, 0
        %vm689 = vcmp.eq.s32.totalorder %v681, 1
        %vm690 = vcmp.eq.s32.totalorder %v682, 1
        %vm691 = vcmp.eq.s32.totalorder %v683, 1
        %vm692 = vcmp.eq.s32.totalorder %v684, 1
        %vm693 = vcmp.eq.s32.totalorder %v685, 1
        %vm694 = vcmp.eq.s32.totalorder %v686, 1
        %vm695 = vcmp.eq.s32.totalorder %v687, 1
        %vm696 = vcmp.eq.s32.totalorder %v688, 1
        %v697 = vsel %vm680, 1, 0
        %vm698 = vcmp.eq.s32.totalorder %v697, 1
        %vm699 = vmand %vm689, %vm698
        %vm700 = vmand %vm690, %vm698
        %vm701 = vmand %vm691, %vm698
        %vm702 = vmand %vm692, %vm698
        %vm703 = vmand %vm693, %vm698
        %vm704 = vmand %vm694, %vm698
        %vm705 = vmand %vm695, %vm698
        %vm706 = vmand %vm696, %vm698
        %vm707 = vmor %vm632, %vm699
        %vm708 = vmor %vm633, %vm700
        %vm709 = vmor %vm634, %vm701
        %vm710 = vmor %vm635, %vm702
        %vm711 = vmor %vm636, %vm703
        %vm712 = vmor %vm637, %vm704
        %vm713 = vmor %vm638, %vm705
        %vm714 = vmor %vm639, %vm706
        %s715 = sadd.s32 %s573, 8
        %s716 = sld [smem:[#allocation3 + %s715]]
        %s717 = sadd.s32 %s573, 9
        %s718 = sld [smem:[#allocation3 + %s717]]
        %s719 = sadd.s32 %s573, 10
        %s720 = sld [smem:[#allocation3 + %s719]]
        %s721 = sadd.s32 %s573, 11
        %s722 = sld [smem:[#allocation3 + %s721]]
        %v723 = vstv %s716
        %vm724 = vcmp.ge.s32.totalorder %v164, %v723
        %vm725 = vcmp.ge.s32.totalorder %v165, %v723
        %vm726 = vcmp.ge.s32.totalorder %v166, %v723
        %vm727 = vcmp.ge.s32.totalorder %v167, %v723
        %vm728 = vcmp.ge.s32.totalorder %v168, %v723
        %vm729 = vcmp.ge.s32.totalorder %v169, %v723
        %vm730 = vcmp.ge.s32.totalorder %v170, %v723
        %vm731 = vcmp.ge.s32.totalorder %v171, %v723
        %s732 = sadd.s32 %s716, %s718
        %v733 = vstv %s732
        %vm734 = vcmp.lt.s32.totalorder %v164, %v733
        %vm735 = vcmp.lt.s32.totalorder %v165, %v733
        %vm736 = vcmp.lt.s32.totalorder %v166, %v733
        %vm737 = vcmp.lt.s32.totalorder %v167, %v733
        %vm738 = vcmp.lt.s32.totalorder %v168, %v733
        %vm739 = vcmp.lt.s32.totalorder %v169, %v733
        %vm740 = vcmp.lt.s32.totalorder %v170, %v733
        %vm741 = vcmp.lt.s32.totalorder %v171, %v733
        %vm742 = vmand %vm724, %vm734
        %vm743 = vmand %vm725, %vm735
        %vm744 = vmand %vm726, %vm736
        %vm745 = vmand %vm727, %vm737
        %vm746 = vmand %vm728, %vm738
        %vm747 = vmand %vm729, %vm739
        %vm748 = vmand %vm730, %vm740
        %vm749 = vmand %vm731, %vm741
        %v750 = vstv %s720
        %vm751 = vcmp.ge.s32.totalorder %v175, %v750
        %s752 = sadd.s32 %s720, %s722
        %v753 = vstv %s752
        %vm754 = vcmp.lt.s32.totalorder %v175, %v753
        %vm755 = vmand %vm751, %vm754
        %v756 = vsel %vm742, 1, 0
        %v757 = vsel %vm743, 1, 0
        %v758 = vsel %vm744, 1, 0
        %v759 = vsel %vm745, 1, 0
        %v760 = vsel %vm746, 1, 0
        %v761 = vsel %vm747, 1, 0
        %v762 = vsel %vm748, 1, 0
        %v763 = vsel %vm749, 1, 0
        %vm764 = vcmp.eq.s32.totalorder %v756, 1
        %vm765 = vcmp.eq.s32.totalorder %v757, 1
        %vm766 = vcmp.eq.s32.totalorder %v758, 1
        %vm767 = vcmp.eq.s32.totalorder %v759, 1
        %vm768 = vcmp.eq.s32.totalorder %v760, 1
        %vm769 = vcmp.eq.s32.totalorder %v761, 1
        %vm770 = vcmp.eq.s32.totalorder %v762, 1
        %vm771 = vcmp.eq.s32.totalorder %v763, 1
        %v772 = vsel %vm755, 1, 0
        %vm773 = vcmp.eq.s32.totalorder %v772, 1
        %vm774 = vmand %vm764, %vm773
        %vm775 = vmand %vm765, %vm773
        %vm776 = vmand %vm766, %vm773
        %vm777 = vmand %vm767, %vm773
        %vm778 = vmand %vm768, %vm773
        %vm779 = vmand %vm769, %vm773
        %vm780 = vmand %vm770, %vm773
        %vm781 = vmand %vm771, %vm773
        %vm782 = vmor %vm707, %vm774
        %vm783 = vmor %vm708, %vm775
        %vm784 = vmor %vm709, %vm776
        %vm785 = vmor %vm710, %vm777
        %vm786 = vmor %vm711, %vm778
        %vm787 = vmor %vm712, %vm779
        %vm788 = vmor %vm713, %vm780
        %vm789 = vmor %vm714, %vm781
        %s790 = sadd.s32 %s573, 12
        %s791 = sld [smem:[#allocation3 + %s790]]
        %s792 = sadd.s32 %s573, 13
        %s793 = sld [smem:[#allocation3 + %s792]]
        %s794 = sadd.s32 %s573, 14
        %s795 = sld [smem:[#allocation3 + %s794]]
        %s796 = sadd.s32 %s573, 15
        %s797 = sld [smem:[#allocation3 + %s796]]
        %v798 = vstv %s791
        %vm799 = vcmp.ge.s32.totalorder %v164, %v798
        %vm800 = vcmp.ge.s32.totalorder %v165, %v798
        %vm801 = vcmp.ge.s32.totalorder %v166, %v798
        %vm802 = vcmp.ge.s32.totalorder %v167, %v798
        %vm803 = vcmp.ge.s32.totalorder %v168, %v798
        %vm804 = vcmp.ge.s32.totalorder %v169, %v798
        %vm805 = vcmp.ge.s32.totalorder %v170, %v798
        %vm806 = vcmp.ge.s32.totalorder %v171, %v798
        %s807 = sadd.s32 %s791, %s793
        %v808 = vstv %s807
        %vm809 = vcmp.lt.s32.totalorder %v164, %v808
        %vm810 = vcmp.lt.s32.totalorder %v165, %v808
        %vm811 = vcmp.lt.s32.totalorder %v166, %v808
        %vm812 = vcmp.lt.s32.totalorder %v167, %v808
        %vm813 = vcmp.lt.s32.totalorder %v168, %v808
        %vm814 = vcmp.lt.s32.totalorder %v169, %v808
        %vm815 = vcmp.lt.s32.totalorder %v170, %v808
        %vm816 = vcmp.lt.s32.totalorder %v171, %v808
        %vm817 = vmand %vm799, %vm809
        %vm818 = vmand %vm800, %vm810
        %vm819 = vmand %vm801, %vm811
        %vm820 = vmand %vm802, %vm812
        %vm821 = vmand %vm803, %vm813
        %vm822 = vmand %vm804, %vm814
        %vm823 = vmand %vm805, %vm815
        %vm824 = vmand %vm806, %vm816
        %v825 = vstv %s795
        %vm826 = vcmp.ge.s32.totalorder %v175, %v825
        %s827 = sadd.s32 %s795, %s797
        %v828 = vstv %s827
        %vm829 = vcmp.lt.s32.totalorder %v175, %v828
        %vm830 = vmand %vm826, %vm829
        %v831 = vsel %vm817, 1, 0
        %v832 = vsel %vm818, 1, 0
        %v833 = vsel %vm819, 1, 0
        %v834 = vsel %vm820, 1, 0
        %v835 = vsel %vm821, 1, 0
        %v836 = vsel %vm822, 1, 0
        %v837 = vsel %vm823, 1, 0
        %v838 = vsel %vm824, 1, 0
        %vm839 = vcmp.eq.s32.totalorder %v831, 1
        %vm840 = vcmp.eq.s32.totalorder %v832, 1
        %vm841 = vcmp.eq.s32.totalorder %v833, 1
        %vm842 = vcmp.eq.s32.totalorder %v834, 1
        %vm843 = vcmp.eq.s32.totalorder %v835, 1
        %vm844 = vcmp.eq.s32.totalorder %v836, 1
        %vm845 = vcmp.eq.s32.totalorder %v837, 1
        %vm846 = vcmp.eq.s32.totalorder %v838, 1
        %v847 = vsel %vm830, 1, 0
        %vm848 = vcmp.eq.s32.totalorder %v847, 1
        %vm849 = vmand %vm839, %vm848
        %vm850 = vmand %vm840, %vm848
        %vm851 = vmand %vm841, %vm848
        %vm852 = vmand %vm842, %vm848
        %vm853 = vmand %vm843, %vm848
        %vm854 = vmand %vm844, %vm848
        %vm855 = vmand %vm845, %vm848
        %vm856 = vmand %vm846, %vm848
        %vm857 = vmor %vm782, %vm849
        %vm858 = vmor %vm783, %vm850
        %vm859 = vmor %vm784, %vm851
        %vm860 = vmor %vm785, %vm852
        %vm861 = vmor %vm786, %vm853
        %vm862 = vmor %vm787, %vm854
        %vm863 = vmor %vm788, %vm855
        %vm864 = vmor %vm789, %vm856
        %s865 = sadd.s32 %s573, 16
        %s866 = sld [smem:[#allocation3 + %s865]]
        %s867 = sadd.s32 %s573, 17
        %s868 = sld [smem:[#allocation3 + %s867]]
        %s869 = sadd.s32 %s573, 18
        %s870 = sld [smem:[#allocation3 + %s869]]
        %s871 = sadd.s32 %s573, 19
        %s872 = sld [smem:[#allocation3 + %s871]]
        %v873 = vstv %s866
        %vm874 = vcmp.ge.s32.totalorder %v164, %v873
        %vm875 = vcmp.ge.s32.totalorder %v165, %v873
        %vm876 = vcmp.ge.s32.totalorder %v166, %v873
        %vm877 = vcmp.ge.s32.totalorder %v167, %v873
        %vm878 = vcmp.ge.s32.totalorder %v168, %v873
        %vm879 = vcmp.ge.s32.totalorder %v169, %v873
        %vm880 = vcmp.ge.s32.totalorder %v170, %v873
        %vm881 = vcmp.ge.s32.totalorder %v171, %v873
        %s882 = sadd.s32 %s866, %s868
        %v883 = vstv %s882
        %vm884 = vcmp.lt.s32.totalorder %v164, %v883
        %vm885 = vcmp.lt.s32.totalorder %v165, %v883
        %vm886 = vcmp.lt.s32.totalorder %v166, %v883
        %vm887 = vcmp.lt.s32.totalorder %v167, %v883
        %vm888 = vcmp.lt.s32.totalorder %v168, %v883
        %vm889 = vcmp.lt.s32.totalorder %v169, %v883
        %vm890 = vcmp.lt.s32.totalorder %v170, %v883
        %vm891 = vcmp.lt.s32.totalorder %v171, %v883
        %vm892 = vmand %vm874, %vm884
        %vm893 = vmand %vm875, %vm885
        %vm894 = vmand %vm876, %vm886
        %vm895 = vmand %vm877, %vm887
        %vm896 = vmand %vm878, %vm888
        %vm897 = vmand %vm879, %vm889
        %vm898 = vmand %vm880, %vm890
        %vm899 = vmand %vm881, %vm891
        %v900 = vstv %s870
        %vm901 = vcmp.ge.s32.totalorder %v175, %v900
        %s902 = sadd.s32 %s870, %s872
        %v903 = vstv %s902
        %vm904 = vcmp.lt.s32.totalorder %v175, %v903
        %vm905 = vmand %vm901, %vm904
        %v906 = vsel %vm892, 1, 0
        %v907 = vsel %vm893, 1, 0
        %v908 = vsel %vm894, 1, 0
        %v909 = vsel %vm895, 1, 0
        %v910 = vsel %vm896, 1, 0
        %v911 = vsel %vm897, 1, 0
        %v912 = vsel %vm898, 1, 0
        %v913 = vsel %vm899, 1, 0
        %vm914 = vcmp.eq.s32.totalorder %v906, 1
        %vm915 = vcmp.eq.s32.totalorder %v907, 1
        %vm916 = vcmp.eq.s32.totalorder %v908, 1
        %vm917 = vcmp.eq.s32.totalorder %v909, 1
        %vm918 = vcmp.eq.s32.totalorder %v910, 1
        %vm919 = vcmp.eq.s32.totalorder %v911, 1
        %vm920 = vcmp.eq.s32.totalorder %v912, 1
        %vm921 = vcmp.eq.s32.totalorder %v913, 1
        %v922 = vsel %vm905, 1, 0
        %vm923 = vcmp.eq.s32.totalorder %v922, 1
        %vm924 = vmand %vm914, %vm923
        %vm925 = vmand %vm915, %vm923
        %vm926 = vmand %vm916, %vm923
        %vm927 = vmand %vm917, %vm923
        %vm928 = vmand %vm918, %vm923
        %vm929 = vmand %vm919, %vm923
        %vm930 = vmand %vm920, %vm923
        %vm931 = vmand %vm921, %vm923
        %vm932 = vmor %vm857, %vm924
        %vm933 = vmor %vm858, %vm925
        %vm934 = vmor %vm859, %vm926
        %vm935 = vmor %vm860, %vm927
        %vm936 = vmor %vm861, %vm928
        %vm937 = vmor %vm862, %vm929
        %vm938 = vmor %vm863, %vm930
        %vm939 = vmor %vm864, %vm931
        %s940 = scalar_lea.vmem %s141, 64 [#allocation4]
        %v941 = vld [vmem:[%s940] sm:$0xff]
        %v942 = vld [vmem:[%s940 + $0x8] sm:$0xff]
        %v943 = vld [vmem:[%s940 + $0x10] sm:$0xff]
        %v944 = vld [vmem:[%s940 + $0x18] sm:$0xff]
        %v945 = vld [vmem:[%s940 + $0x20] sm:$0xff]
        %v946 = vld [vmem:[%s940 + $0x28] sm:$0xff]
        %v947 = vld [vmem:[%s940 + $0x30] sm:$0xff]
        %v948 = vld [vmem:[%s940 + $0x38] sm:$0xff]
        %v949 = vsel %vm932, 0.0, %v941
        %v950 = vsel %vm933, 0.0, %v942
        %v951 = vsel %vm934, 0.0, %v943
        %v952 = vsel %vm935, 0.0, %v944
        %v953 = vsel %vm936, 0.0, %v945
        %v954 = vsel %vm937, 0.0, %v946
        %v955 = vsel %vm938, 0.0, %v947
        %v956 = vsel %vm939, 0.0, %v948
        %s957 = scalar_lea.vmem %s159, 64 [#allocation7]
        %958 = vst [vmem:[%s957] sm:$0xff] %v949
        %959 = vst [vmem:[%s957 + $0x8] sm:$0xff] %v950
        %960 = vst [vmem:[%s957 + $0x10] sm:$0xff] %v951
        %961 = vst [vmem:[%s957 + $0x18] sm:$0xff] %v952
        %962 = vst [vmem:[%s957 + $0x20] sm:$0xff] %v953
        %963 = vst [vmem:[%s957 + $0x28] sm:$0xff] %v954
        %964 = vst [vmem:[%s957 + $0x30] sm:$0xff] %v955
        %965 = vst [vmem:[%s957 + $0x38] sm:$0xff] %v956
        %s966 = sand.u32 %s75, 1
        %s967 = scalar_lea.sflag [#allocation6], %s966
        %s968 = sand.u32 %s75, 1
        %s969 = smul.addr %s968, 128
        %s970 = scalar_lea.vmem [#allocation7], %s969
        // Predicated region
        $region29: #{tpu_custom_call.1} parent=23 // pred_check
          %p971 = pneg %p85
        $region30: #{tpu_custom_call.1} parent=23 // pred_check_branch
          %973 = sbr.rel (%p971) target = $region32
        $region31: #{tpu_custom_call.1} parent=23 // pred_region
          %s974 = smul.u32 2, %s29
          %s976 = ssub.s32 2048, 2048
          %977 = vsyncadd %s967, %s976
          %s978 = smul.addr %s974, 16
          %s979 = sadd.s32 %s30, %s978
          %s980 = smul.addr %s979, 128
          %s981 = scalar_lea.hbm %s2, %s980
          %s982 = sshll.u32 %s970, 4
          %s983 = int_to_ptr.vmem [resolvable:$true] %s982
          %988 = dma.vmem_to_hbm [thread:$0]  %s983, 2048, %s981, %s967, 128, 256, 8
        $region32: #{tpu_custom_call.1} parent=23 // pred_fallthru
          _
      $region24: #{tpu_custom_call.1} parent=5 // pred_fallthru
        _
      %p989 = scmp.le.s32.totalorder 2, %s20
      // Predicated region
      $region33: #{tpu_custom_call.1} parent=5 // pred_check
        %p990 = pneg %p989
      $region34: #{tpu_custom_call.1} parent=5 // pred_check_branch
        %992 = sbr.rel (%p990) target = $region36
      $region35: #{tpu_custom_call.1} parent=5 // pred_region
        %s993 = ssub.s32 %s20, 2
        // Predicated region
        $region37: #{tpu_custom_call.1} parent=35 // pred_check
          %p994 = pneg %p91
        $region38: #{tpu_custom_call.1} parent=35 // pred_check_branch
          %996 = sbr.rel (%p994) target = $region40
        $region39: #{tpu_custom_call.1} parent=35 // pred_region
          %s997 = sand.u32 %s76, 1
          %s998 = scalar_lea.sflag [#allocation6], %s997
          %s999 = sand.u32 %s76, 1
          %s1000 = smul.addr %s999, 128
          %s1001 = scalar_lea.vmem [#allocation7], %s1000
          %1002 = dma.done %s998, 2048
        $region40: #{tpu_custom_call.1} parent=35 // pred_fallthru
          _
      $region36: #{tpu_custom_call.1} parent=5 // pred_fallthru
        _
    $region6: #{tpu_custom_call.1} parent=1 // loop_footer
      %s24 = sadd.s32 1, %s20
    $region7: #{tpu_custom_call.1} parent=1 // loop_footer_branch
      %19 = sbr.rel target = $region3
    $region8: #{tpu_custom_call.1} parent=1 // loop_exit
      _
    %1003 = vsyncpa [#allocation5], 1
    %s1004 = scalar_lea.sflag [#allocation5], 1
    %1005 = vsyncpa %s1004, 1
    %1006 = vsyncpa [#allocation6], 1
    %s1007 = scalar_lea.sflag [#allocation6], 1
    %1008 = vsyncpa %s1007, 1

</llo_original>
